<compile_context>
chip_gen: v7x
topology: tpu7x:2x2x1
jax: 0.10.0
libtpu: 0.0.40
codegen_flags: <defaults>
</compile_context>

<pallas_src>
import numpy as np
import jax
import jax.numpy as jnp
from jax.experimental import pallas as pl
from jax.experimental.pallas import tpu as pltpu


# ----------------------------------------------------------------------------
# Gaussian / folded-operator construction (numpy, trace time)
# ----------------------------------------------------------------------------

def _gauss_1d(scale):
    """1-D normalized Gaussian matching AntiAliasInterpolation2d.__init__."""
    sigma = (1.0 / scale - 1.0) / 2.0
    ks = 2 * round(sigma * 4) + 1
    ka = ks // 2                      # kb == ka (ks is always odd)
    mean = (ks - 1) / 2.0
    g = np.exp(-((np.arange(ks, dtype=np.float32) - mean) ** 2)
               / (2.0 * sigma ** 2))
    g = (g / g.sum()).astype(np.float32)
    st = int(round(1.0 / scale))      # round, not floor (review note)
    return g, ks, ka, st


def _banded_1d(g, ka, st, size_in):
    """(size_out, size_in) matrix = zero-pad + 1-D blur + stride-subsample."""
    ks = g.shape[0]
    size_out = len(range(0, size_in, st))
    m = np.zeros((size_out, size_in), np.float32)
    for o in range(size_out):
        for i in range(size_in):
            k = i + ka - st * o
            if 0 <= k < ks:
                m[o, i] = g[k]
    return m


def _folded_matrix(scale, H, W):
    """Mt of shape (H*W, Ho*Wo): out_flat = x_flat @ Mt reproduces
    pad -> depthwise Gaussian conv -> [::st, ::st] for one image-channel."""
    g, _, ka, st = _gauss_1d(scale)
    gh = _banded_1d(g, ka, st, H)       # (Ho, H)
    gw = _banded_1d(g, ka, st, W)       # (Wo, W)
    m = np.kron(gh, gw)                 # (Ho*Wo, H*W)
    return np.ascontiguousarray(m.T).astype(np.float32), gh.shape[0], gw.shape[0]


# ----------------------------------------------------------------------------
# Pallas kernel: one MXU matmul per scale, all scales fused
# ----------------------------------------------------------------------------

def _make_pyramid_kernel(n_scales):
    def kernel(x_ref, *refs):
        m_refs = refs[:n_scales]
        o_refs = refs[n_scales:]
        xv = x_ref[...]                             # (bm, H*W), lane-dense
        for m_ref, o_ref in zip(m_refs, o_refs):
            o_ref[...] = jnp.dot(
                xv, m_ref[...], preferred_element_type=jnp.float32
            ).astype(o_ref.dtype)
    return kernel


def _pyramid_pallas(x, mats, out_hw):
    """Run all non-identity scales in one pallas_call. Returns list of NCHW."""
    N, C, H, W = x.shape
    B, S = N * C, H * W
    x2 = x.reshape(B, S)          # free bitcast; lane axis = H*W (lane-dense)
    n = len(mats)

    # Row tile: single grid step for small inputs; multiples of 8 otherwise.
    bm = B if B <= 256 else 256
    grid = (pl.cdiv(B, bm),)

    in_specs = [pl.BlockSpec((bm, S), lambda i: (i, 0))]
    out_specs = []
    out_shape = []
    for m, (ho, wo) in zip(mats, out_hw):
        so = ho * wo
        in_specs.append(pl.BlockSpec((S, so), lambda i: (0, 0)))
        out_specs.append(pl.BlockSpec((bm, so), lambda i: (i, 0)))
        out_shape.append(jax.ShapeDtypeStruct((B, so), x.dtype))

    outs = pl.pallas_call(
        _make_pyramid_kernel(n),
        grid=grid,
        in_specs=in_specs,
        out_specs=tuple(out_specs),
        out_shape=tuple(out_shape),
        compiler_params=pltpu.CompilerParams(
            dimension_semantics=("parallel",),
            vmem_limit_bytes=32 * 1024 * 1024,
        ),
    )(x2, *mats)

    if not isinstance(outs, (tuple, list)):
        outs = (outs,)
    return [o.reshape(N, C, ho, wo) for o, (ho, wo) in zip(outs, out_hw)]


# ----------------------------------------------------------------------------
# Module wrapper
# ----------------------------------------------------------------------------

class ImagePyramide:
    """Pallas/JAX equivalent of TPSMM ImagePyramide (all scales in one kernel)."""

    def __init__(self, scales, num_channels):
        self.scales = list(scales)
        self.num_channels = num_channels  # interface parity; blur is identical
                                          # for every channel (depthwise, shared kernel)

    def __call__(self, x):
        N, C, H, W = x.shape
        out_dict = {}
        work = []
        for scale in self.scales:
            key = "prediction_" + str(scale).replace("-", ".")
            if float(scale) == 1.0:
                out_dict[key] = x
            else:
                work.append((key, float(scale)))
        if work:
            mats, out_hw = [], []
            for _, s in work:
                mt, ho, wo = _folded_matrix(s, H, W)
                mats.append(jnp.asarray(mt))
                out_hw.append((ho, wo))
            res = _pyramid_pallas(x, mats, out_hw)
            for (key, _), r in zip(work, res):
                out_dict[key] = r
        return out_dict


# ----------------------------------------------------------------------------
# Pure-JAX reference of the PyTorch forward (for self-check)
# ----------------------------------------------------------------------------

def _reference_scale(x, scale):
    if float(scale) == 1.0:
        return x
    g, ks, ka, st = _gauss_1d(scale)
    k2 = np.outer(g, g)          # == torch 2D kernel (normalized outer product)
    N, C, H, W = x.shape
    xp = jnp.pad(x, ((0, 0), (0, 0), (ka, ka), (ka, ka)))
    acc = jnp.zeros((N, C, H, W), jnp.float32)
    for ki in range(ks):
        for kj in range(ks):
            acc = acc + float(k2[ki, kj]) * xp[:, :, ki:ki + H, kj:kj + W]
    return acc[:, :, ::st, ::st].astype(x.dtype)


if __name__ == "__main__":
    scales = [1, 0.5, 0.25]
    num_channels = 4

    key = jax.random.PRNGKey(0)
    x = jax.random.normal(key, (2, num_channels, 16, 16), dtype=jnp.float32)

    pyramide = ImagePyramide(scales, num_channels)
    out = pyramide(x)
    for k in sorted(out.keys()):
        jax.block_until_ready(out[k])

    # Shape sanity (matches PyTorch stride-subsampled outputs).
    assert out["prediction_1"].shape == (2, num_channels, 16, 16)
    assert out["prediction_0.5"].shape == (2, num_channels, 8, 8)
    assert out["prediction_0.25"].shape == (2, num_channels, 4, 4)

    # Numerical cross-check vs pure-JAX reference of the PyTorch forward.
    # Tolerance is loose enough to absorb possible bf16-pass MXU f32 matmuls.
    for s in scales:
        kname = "prediction_" + str(s).replace("-", ".")
        ref = _reference_scale(x, s)
        np.testing.assert_allclose(np.asarray(out[kname]), np.asarray(ref),
                                   rtol=2e-2, atol=2e-2)

    print("KERNEL_OK")
</pallas_src>

<mosaic_0001>
module attributes {stable_mosaic.version = 11 : i64} {
  func.func @kernel(%arg0: i32, %arg1: memref<8x256xf32, #tpu.memory_space<vmem>>, %arg2: memref<256x64xf32, #tpu.memory_space<vmem>>, %arg3: memref<256x16xf32, #tpu.memory_space<vmem>>, %arg4: memref<8x64xf32, #tpu.memory_space<vmem>>, %arg5: memref<8x16xf32, #tpu.memory_space<vmem>>) attributes {dimension_semantics = [#tpu.dimension_semantics<parallel>], iteration_bounds = array<i64: 1>, scalar_prefetch = 0 : i64, scratch_operands = 0 : i64, tpu.core_type = #tpu.core_type<tc>, window_params = [{transform_indices = @transform_0, window_bounds = array<i64: 8, 256>}, {pipeline_mode = #tpu.pipeline_mode<synchronous>, transform_indices = @transform_1, window_bounds = array<i64: 256, 64>}, {pipeline_mode = #tpu.pipeline_mode<synchronous>, transform_indices = @transform_2, window_bounds = array<i64: 256, 16>}, {transform_indices = @transform_3, window_bounds = array<i64: 8, 64>}, {transform_indices = @transform_4, window_bounds = array<i64: 8, 16>}]} {
    %c0 = arith.constant 0 : index
    %c0_0 = arith.constant 0 : index
    %0 = vector.load %arg1[%c0, %c0_0] : memref<8x256xf32, #tpu.memory_space<vmem>>, vector<8x256xf32>
    %c0_1 = arith.constant 0 : index
    %c0_2 = arith.constant 0 : index
    %1 = vector.load %arg2[%c0_1, %c0_2] : memref<256x64xf32, #tpu.memory_space<vmem>>, vector<256x64xf32>
    %cst = arith.constant dense<0.000000e+00> : vector<8x64xf32>
    %2 = tpu.matmul %0, %1, %cst {dimension_numbers = #tpu.dot_dimension_numbers<[1], [0], [0], [1], [0, 0, 1, 1], [], []>} : vector<8x256xf32>, vector<256x64xf32>, vector<8x64xf32> -> vector<8x64xf32>
    %c0_3 = arith.constant 0 : index
    %c0_4 = arith.constant 0 : index
    %3 = vector.load %arg4[%c0_3, %c0_4] : memref<8x64xf32, #tpu.memory_space<vmem>>, vector<8x64xf32>
    tpu.vector_store %arg4[%c0_3, %c0_4], %2 {strides = array<i32>} : memref<8x64xf32, #tpu.memory_space<vmem>>, vector<8x64xf32>,
    %c0_5 = arith.constant 0 : index
    %c0_6 = arith.constant 0 : index
    %4 = vector.load %arg3[%c0_5, %c0_6] : memref<256x16xf32, #tpu.memory_space<vmem>>, vector<256x16xf32>
    %cst_7 = arith.constant dense<0.000000e+00> : vector<8x16xf32>
    %5 = tpu.matmul %0, %4, %cst_7 {dimension_numbers = #tpu.dot_dimension_numbers<[1], [0], [0], [1], [0, 0, 1, 1], [], []>} : vector<8x256xf32>, vector<256x16xf32>, vector<8x16xf32> -> vector<8x16xf32>
    %c0_8 = arith.constant 0 : index
    %c0_9 = arith.constant 0 : index
    %6 = vector.load %arg5[%c0_8, %c0_9] : memref<8x16xf32, #tpu.memory_space<vmem>>, vector<8x16xf32>
    tpu.vector_store %arg5[%c0_8, %c0_9], %5 {strides = array<i32>} : memref<8x16xf32, #tpu.memory_space<vmem>>, vector<8x16xf32>,
    return
  }
  func.func @transform_0(%arg0: i32) -> (i32, i32) {
    %c0_i32 = arith.constant 0 : i32
    %c0_i32_0 = arith.constant 0 : i32
    return %arg0, %c0_i32 : i32, i32
  }
  func.func @transform_1(%arg0: i32) -> (i32, i32) {
    %c0_i32 = arith.constant 0 : i32
    %c0_i32_0 = arith.constant 0 : i32
    %c0_i32_1 = arith.constant 0 : i32
    return %c0_i32, %c0_i32_0 : i32, i32
  }
  func.func @transform_2(%arg0: i32) -> (i32, i32) {
    %c0_i32 = arith.constant 0 : i32
    %c0_i32_0 = arith.constant 0 : i32
    %c0_i32_1 = arith.constant 0 : i32
    return %c0_i32, %c0_i32_0 : i32, i32
  }
  func.func @transform_3(%arg0: i32) -> (i32, i32) {
    %c0_i32 = arith.constant 0 : i32
    %c0_i32_0 = arith.constant 0 : i32
    return %arg0, %c0_i32 : i32, i32
  }
  func.func @transform_4(%arg0: i32) -> (i32, i32) {
    %c0_i32 = arith.constant 0 : i32
    %c0_i32_0 = arith.constant 0 : i32
    return %arg0, %c0_i32 : i32, i32
  }
}

</mosaic_0001>

<llo_original>
// kernel: tpu_custom_call.1
$region0: #{tpu_custom_call.1}
  #allocation0 [shape = 'u32[]', space=smem, size = 0x4, offset = 0x4, fixed_abs, tag = 'smem constant byte address 0x4 - core index']
  #allocation1 [shape = 'u32[144,128]{1,0:T(1,128)}', space=vmem, size = 0x12000, scoped, tag = 'internal scratch']
  %s0 = inlined_call_operand.vmem [shape: f32[8,256], index: 0, kind: input, shape index: {}]
  %s1 = inlined_call_operand.vmem [shape: f32[256,64], index: 1, kind: input, shape index: {}]
  %s2 = inlined_call_operand.vmem [shape: f32[256,16], index: 2, kind: input, shape index: {}]
  %s3 = inlined_call_operand.hbm [shape: f32[8,64], index: 3, kind: output, shape index: {0}]
  %s4 = inlined_call_operand.hbm [shape: f32[8,16], index: 4, kind: output, shape index: {1}]
  %5 = xla_tuple %s3, %s4
  %s6 = sld [smem:[#allocation0]]
  $region30: #{tpu_custom_call.1} parent=0
    _
  %s8 = ssub.s32 1, %s6
  %s9 = scalar_select 0, %s8, %s6
  $region1: #{tpu_custom_call.1} parent=0
    #allocation2 [shape = 'u8[4096]{0}', space=vmem, size = 0x1000, scoped, tag = 'output window, operand 0, single buffered']
    #allocation3 [shape = 's32[1]{0}', space=sflag, size = 0x4, scoped, tag = 'scoped memory for tpu_custom_call.1']
    #allocation4 [shape = 'u8[4096]{0}', space=vmem, size = 0x1000, scoped, tag = 'output window, operand 1, single buffered']
    #allocation5 [shape = 's32[1]{0}', space=sflag, size = 0x4, scoped, tag = 'scoped memory for tpu_custom_call.1']
    %10 = vsyncpa [#allocation3], 0
    %11 = vsyncpa [#allocation5], 0
    // Predicated region
    $region2: #{tpu_custom_call.1} parent=1 // pred_check
      _
    $region3: #{tpu_custom_call.1} parent=1 // pred_check_branch
      %13 = sbr.rel (0) target = $region5
    $region4: #{tpu_custom_call.1} parent=1 // pred_region
      _
    $region5: #{tpu_custom_call.1} parent=1 // pred_fallthru
      _
    // Predicated region
    $region6: #{tpu_custom_call.1} parent=1 // pred_check
      _
    $region7: #{tpu_custom_call.1} parent=1 // pred_check_branch
      %15 = sbr.rel (0) target = $region9
    $region8: #{tpu_custom_call.1} parent=1 // pred_region
      _
    $region9: #{tpu_custom_call.1} parent=1 // pred_fallthru
      _
    // Predicated region
    $region10: #{tpu_custom_call.1} parent=1 // pred_check
      _
    $region11: #{tpu_custom_call.1} parent=1 // pred_check_branch
      %17 = sbr.rel (0) target = $region13
    $region12: #{tpu_custom_call.1} parent=1 // pred_region
      _
    $region13: #{tpu_custom_call.1} parent=1 // pred_fallthru
      _
    %v18 = vld [vmem:[%s0] sm:$0xff]
    %v19 = vld [vmem:[%s0 + $0x8] sm:$0xff]
    %v20 = vld [vmem:[%s1] sm:$0xff]
    %v21 = vld [vmem:[%s1 + $0x8] sm:$0xff]
    %v22 = vld [vmem:[%s1 + $0x10] sm:$0xff]
    %v23 = vld [vmem:[%s1 + $0x18] sm:$0xff]
    %v24 = vld [vmem:[%s1 + $0x20] sm:$0xff]
    %v25 = vld [vmem:[%s1 + $0x28] sm:$0xff]
    %v26 = vld [vmem:[%s1 + $0x30] sm:$0xff]
    %v27 = vld [vmem:[%s1 + $0x38] sm:$0xff]
    %v28 = vld [vmem:[%s1 + $0x40] sm:$0xff]
    %v29 = vld [vmem:[%s1 + $0x48] sm:$0xff]
    %v30 = vld [vmem:[%s1 + $0x50] sm:$0xff]
    %v31 = vld [vmem:[%s1 + $0x58] sm:$0xff]
    %v32 = vld [vmem:[%s1 + $0x60] sm:$0xff]
    %v33 = vld [vmem:[%s1 + $0x68] sm:$0xff]
    %v34 = vld [vmem:[%s1 + $0x70] sm:$0xff]
    %v35 = vld [vmem:[%s1 + $0x78] sm:$0xff]
    %v36 = vld [vmem:[%s1 + $0x80] sm:$0xff]
    %v37 = vld [vmem:[%s1 + $0x88] sm:$0xff]
    %v38 = vld [vmem:[%s1 + $0x90] sm:$0xff]
    %v39 = vld [vmem:[%s1 + $0x98] sm:$0xff]
    %v40 = vld [vmem:[%s1 + $0xa0] sm:$0xff]
    %v41 = vld [vmem:[%s1 + $0xa8] sm:$0xff]
    %v42 = vld [vmem:[%s1 + $0xb0] sm:$0xff]
    %v43 = vld [vmem:[%s1 + $0xb8] sm:$0xff]
    %v44 = vld [vmem:[%s1 + $0xc0] sm:$0xff]
    %v45 = vld [vmem:[%s1 + $0xc8] sm:$0xff]
    %v46 = vld [vmem:[%s1 + $0xd0] sm:$0xff]
    %v47 = vld [vmem:[%s1 + $0xd8] sm:$0xff]
    %v48 = vld [vmem:[%s1 + $0xe0] sm:$0xff]
    %v49 = vld [vmem:[%s1 + $0xe8] sm:$0xff]
    %v50 = vld [vmem:[%s1 + $0xf0] sm:$0xff]
    %v51 = vld [vmem:[%s1 + $0xf8] sm:$0xff]
    %52 = vmatprep.subr.mxu0 0.0
    %53 = vmatpush1.msra.mxu0 %v20
    %54 = vmatprep.subr.mxu0 0.0
    %55 = vmatpush1.msra.mxu0 %v21
    %56 = vmatprep.subr.mxu0 0.0
    %57 = vmatpush1.msra.mxu0 %v22
    %58 = vmatprep.subr.mxu0 0.0
    %59 = vmatpush1.msra.mxu0 %v23
    %60 = vmatprep.subr.mxu0 0.0
    %61 = vmatpush1.msra.mxu0 %v24
    %62 = vmatprep.subr.mxu0 0.0
    %63 = vmatpush1.msra.mxu0 %v25
    %64 = vmatprep.subr.mxu0 0.0
    %65 = vmatpush1.msra.mxu0 %v26
    %66 = vmatprep.subr.mxu0 0.0
    %67 = vmatpush1.msra.mxu0 %v27
    %68 = vmatprep.subr.mxu0 0.0
    %69 = vmatpush1.msra.mxu0 %v28
    %70 = vmatprep.subr.mxu0 0.0
    %71 = vmatpush1.msra.mxu0 %v29
    %72 = vmatprep.subr.mxu0 0.0
    %73 = vmatpush1.msra.mxu0 %v30
    %74 = vmatprep.subr.mxu0 0.0
    %75 = vmatpush1.msra.mxu0 %v31
    %76 = vmatprep.subr.mxu0 0.0
    %77 = vmatpush1.msra.mxu0 %v32
    %78 = vmatprep.subr.mxu0 0.0
    %79 = vmatpush1.msra.mxu0 %v33
    %80 = vmatprep.subr.mxu0 0.0
    %81 = vmatpush1.msra.mxu0 %v34
    %82 = vmatprep.subr.mxu0 0.0
    %83 = vmatpush1.msra.mxu0 %v35
    %84 = vmatprep.subr.mxu0 0.0
    %85 = vmatpush1.msra.mxu0 %v36
    %86 = vmatprep.subr.mxu0 0.0
    %87 = vmatpush1.msra.mxu0 %v37
    %88 = vmatprep.subr.mxu0 0.0
    %89 = vmatpush1.msra.mxu0 %v38
    %90 = vmatprep.subr.mxu0 0.0
    %91 = vmatpush1.msra.mxu0 %v39
    %92 = vmatprep.subr.mxu0 0.0
    %93 = vmatpush1.msra.mxu0 %v40
    %94 = vmatprep.subr.mxu0 0.0
    %95 = vmatpush1.msra.mxu0 %v41
    %96 = vmatprep.subr.mxu0 0.0
    %97 = vmatpush1.msra.mxu0 %v42
    %98 = vmatprep.subr.mxu0 0.0
    %99 = vmatpush1.msra.mxu0 %v43
    %100 = vmatprep.subr.mxu0 0.0
    %101 = vmatpush1.msra.mxu0 %v44
    %102 = vmatprep.subr.mxu0 0.0
    %103 = vmatpush1.msra.mxu0 %v45
    %104 = vmatprep.subr.mxu0 0.0
    %105 = vmatpush1.msra.mxu0 %v46
    %106 = vmatprep.subr.mxu0 0.0
    %107 = vmatpush1.msra.mxu0 %v47
    %108 = vmatprep.subr.mxu0 0.0
    %109 = vmatpush1.msra.mxu0 %v48
    %110 = vmatprep.subr.mxu0 0.0
    %111 = vmatpush1.msra.mxu0 %v49
    %112 = vmatprep.subr.mxu0 0.0
    %113 = vmatpush1.msra.mxu0 %v50
    %114 = vmatprep.subr.mxu0 0.0
    %115 = vmatpush1.msra.mxu0 %v51
    %116 = vmatprep.mubr.f32.mxu0 %v19
    %117 = vmatmul.mubr.f32.gmra.mrb[0].mxu0 %v18
    %v118 = vpop.f32.mrb[0].mxu0
    %v119 = vadd.f32 0.0, %v118
    %v120 = vpop.f32.mrb[0].mxu0
    %121 = vdwg.mxu0
    %vm122 = vcmask 523264
    %123 = vst.msk [vmem:[#allocation2] sm:$0xff] %vm122, %v119
    %v124 = vld [vmem:[%s2] sm:$0xff]
    %v125 = vld [vmem:[%s2 + $0x8] sm:$0xff]
    %v126 = vld [vmem:[%s2 + $0x10] sm:$0xff]
    %v127 = vld [vmem:[%s2 + $0x18] sm:$0xff]
    %v128 = vld [vmem:[%s2 + $0x20] sm:$0xff]
    %v129 = vld [vmem:[%s2 + $0x28] sm:$0xff]
    %v130 = vld [vmem:[%s2 + $0x30] sm:$0xff]
    %v131 = vld [vmem:[%s2 + $0x38] sm:$0xff]
    %v132 = vld [vmem:[%s2 + $0x40] sm:$0xff]
    %v133 = vld [vmem:[%s2 + $0x48] sm:$0xff]
    %v134 = vld [vmem:[%s2 + $0x50] sm:$0xff]
    %v135 = vld [vmem:[%s2 + $0x58] sm:$0xff]
    %v136 = vld [vmem:[%s2 + $0x60] sm:$0xff]
    %v137 = vld [vmem:[%s2 + $0x68] sm:$0xff]
    %v138 = vld [vmem:[%s2 + $0x70] sm:$0xff]
    %v139 = vld [vmem:[%s2 + $0x78] sm:$0xff]
    %v140 = vld [vmem:[%s2 + $0x80] sm:$0xff]
    %v141 = vld [vmem:[%s2 + $0x88] sm:$0xff]
    %v142 = vld [vmem:[%s2 + $0x90] sm:$0xff]
    %v143 = vld [vmem:[%s2 + $0x98] sm:$0xff]
    %v144 = vld [vmem:[%s2 + $0xa0] sm:$0xff]
    %v145 = vld [vmem:[%s2 + $0xa8] sm:$0xff]
    %v146 = vld [vmem:[%s2 + $0xb0] sm:$0xff]
    %v147 = vld [vmem:[%s2 + $0xb8] sm:$0xff]
    %v148 = vld [vmem:[%s2 + $0xc0] sm:$0xff]
    %v149 = vld [vmem:[%s2 + $0xc8] sm:$0xff]
    %v150 = vld [vmem:[%s2 + $0xd0] sm:$0xff]
    %v151 = vld [vmem:[%s2 + $0xd8] sm:$0xff]
    %v152 = vld [vmem:[%s2 + $0xe0] sm:$0xff]
    %v153 = vld [vmem:[%s2 + $0xe8] sm:$0xff]
    %v154 = vld [vmem:[%s2 + $0xf0] sm:$0xff]
    %v155 = vld [vmem:[%s2 + $0xf8] sm:$0xff]
    %156 = vmatprep.subr.mxu0 0.0
    %157 = vmatpush1.msra.mxu0 %v124
    %158 = vmatprep.subr.mxu0 0.0
    %159 = vmatpush1.msra.mxu0 %v125
    %160 = vmatprep.subr.mxu0 0.0
    %161 = vmatpush1.msra.mxu0 %v126
    %162 = vmatprep.subr.mxu0 0.0
    %163 = vmatpush1.msra.mxu0 %v127
    %164 = vmatprep.subr.mxu0 0.0
    %165 = vmatpush1.msra.mxu0 %v128
    %166 = vmatprep.subr.mxu0 0.0
    %167 = vmatpush1.msra.mxu0 %v129
    %168 = vmatprep.subr.mxu0 0.0
    %169 = vmatpush1.msra.mxu0 %v130
    %170 = vmatprep.subr.mxu0 0.0
    %171 = vmatpush1.msra.mxu0 %v131
    %172 = vmatprep.subr.mxu0 0.0
    %173 = vmatpush1.msra.mxu0 %v132
    %174 = vmatprep.subr.mxu0 0.0
    %175 = vmatpush1.msra.mxu0 %v133
    %176 = vmatprep.subr.mxu0 0.0
    %177 = vmatpush1.msra.mxu0 %v134
    %178 = vmatprep.subr.mxu0 0.0
    %179 = vmatpush1.msra.mxu0 %v135
    %180 = vmatprep.subr.mxu0 0.0
    %181 = vmatpush1.msra.mxu0 %v136
    %182 = vmatprep.subr.mxu0 0.0
    %183 = vmatpush1.msra.mxu0 %v137
    %184 = vmatprep.subr.mxu0 0.0
    %185 = vmatpush1.msra.mxu0 %v138
    %186 = vmatprep.subr.mxu0 0.0
    %187 = vmatpush1.msra.mxu0 %v139
    %188 = vmatprep.subr.mxu0 0.0
    %189 = vmatpush1.msra.mxu0 %v140
    %190 = vmatprep.subr.mxu0 0.0
    %191 = vmatpush1.msra.mxu0 %v141
    %192 = vmatprep.subr.mxu0 0.0
    %193 = vmatpush1.msra.mxu0 %v142
    %194 = vmatprep.subr.mxu0 0.0
    %195 = vmatpush1.msra.mxu0 %v143
    %196 = vmatprep.subr.mxu0 0.0
    %197 = vmatpush1.msra.mxu0 %v144
    %198 = vmatprep.subr.mxu0 0.0
    %199 = vmatpush1.msra.mxu0 %v145
    %200 = vmatprep.subr.mxu0 0.0
    %201 = vmatpush1.msra.mxu0 %v146
    %202 = vmatprep.subr.mxu0 0.0
    %203 = vmatpush1.msra.mxu0 %v147
    %204 = vmatprep.subr.mxu0 0.0
    %205 = vmatpush1.msra.mxu0 %v148
    %206 = vmatprep.subr.mxu0 0.0
    %207 = vmatpush1.msra.mxu0 %v149
    %208 = vmatprep.subr.mxu0 0.0
    %209 = vmatpush1.msra.mxu0 %v150
    %210 = vmatprep.subr.mxu0 0.0
    %211 = vmatpush1.msra.mxu0 %v151
    %212 = vmatprep.subr.mxu0 0.0
    %213 = vmatpush1.msra.mxu0 %v152
    %214 = vmatprep.subr.mxu0 0.0
    %215 = vmatpush1.msra.mxu0 %v153
    %216 = vmatprep.subr.mxu0 0.0
    %217 = vmatpush1.msra.mxu0 %v154
    %218 = vmatprep.subr.mxu0 0.0
    %219 = vmatpush1.msra.mxu0 %v155
    %220 = vmatprep.mubr.f32.mxu0 %v19
    %221 = vmatmul.mubr.f32.gmra.mrb[0].mxu0 %v18
    %v222 = vpop.f32.mrb[0].mxu0
    %v223 = vadd.f32 0.0, %v222
    %v224 = vpop.f32.mrb[0].mxu0
    %225 = vdwg.mxu0
    %vm226 = vcmask 130048
    %227 = vst.msk [vmem:[#allocation4] sm:$0xff] %vm226, %v223
    // Predicated region
    $region14: #{tpu_custom_call.1} parent=1 // pred_check
      _
    $region15: #{tpu_custom_call.1} parent=1 // pred_check_branch
      %229 = sbr.rel (0) target = $region17
    $region16: #{tpu_custom_call.1} parent=1 // pred_region
      %s231 = ssub.s32 128, 128
      %232 = vsyncadd [#allocation3], %s231
      %s234 = sshll.u32 [#allocation2], 4
      %s235 = int_to_ptr.vmem [resolvable:$true] %s234
      %237 = dma.vmem_to_hbm [thread:$0]  %s235, 128, %s3, [#allocation3]
    $region17: #{tpu_custom_call.1} parent=1 // pred_fallthru
      _
    // Predicated region
    $region18: #{tpu_custom_call.1} parent=1 // pred_check
      _
    $region19: #{tpu_custom_call.1} parent=1 // pred_check_branch
      %239 = sbr.rel (0) target = $region21
    $region20: #{tpu_custom_call.1} parent=1 // pred_region
      %s241 = ssub.s32 128, 128
      %242 = vsyncadd [#allocation5], %s241
      %s244 = sshll.u32 [#allocation4], 4
      %s245 = int_to_ptr.vmem [resolvable:$true] %s244
      %247 = dma.vmem_to_hbm [thread:$0]  %s245, 128, %s4, [#allocation5]
    $region21: #{tpu_custom_call.1} parent=1 // pred_fallthru
      _
    // Predicated region
    $region22: #{tpu_custom_call.1} parent=1 // pred_check
      _
    $region23: #{tpu_custom_call.1} parent=1 // pred_check_branch
      %249 = sbr.rel (0) target = $region25
    $region24: #{tpu_custom_call.1} parent=1 // pred_region
      %250 = dma.done [#allocation3], 128
    $region25: #{tpu_custom_call.1} parent=1 // pred_fallthru
      _
    // Predicated region
    $region26: #{tpu_custom_call.1} parent=1 // pred_check
      _
    $region27: #{tpu_custom_call.1} parent=1 // pred_check_branch
      %252 = sbr.rel (0) target = $region29
    $region28: #{tpu_custom_call.1} parent=1 // pred_region
      %253 = dma.done [#allocation5], 128
    $region29: #{tpu_custom_call.1} parent=1 // pred_fallthru
      _
    %254 = vsyncpa [#allocation3], 1
    %255 = vsyncpa [#allocation5], 1

</llo_original>
